<compile_context>
chip_gen: v7x
topology: tpu7x:2x2x1
jax: 0.10.0
libtpu: 0.0.40
codegen_flags: <defaults>
</compile_context>

<pallas_src>
import jax
import jax.numpy as jnp
from jax.experimental import pallas as pl
from jax.experimental.pallas import tpu as pltpu


def _mul_mean_kernel(mean_ref, x_ref, o_ref):
    # mean_ref: (1, tile_snp), x_ref / o_ref: (tile_b, tile_snp).
    # Pure VPU elementwise multiply with a sublane broadcast of the mean row;
    # memory-bound, so no further in-kernel tuning is warranted.
    o_ref[...] = (x_ref[...] * mean_ref[...]).astype(o_ref.dtype)


def input_layer_forward(x, weights, *, max_tile_snp=2048, max_tile_b=512,
                        force_pallas=False):
    """x: (B, n_snp); weights: (1, n_QT, n_snp). Returns x * weights.mean(axis=1)."""
    assert weights.ndim == 3 and weights.shape[0] == 1
    B, n_snp = x.shape
    n_qt = weights.shape[1]
    assert weights.shape[2] == n_snp

    # --- Hoisted pre-pass: per-SNP mean over the QT axis -> (1, n_snp). -----
    # n_snp elements of extra HBM traffic; negligible vs. the B*n_snp stream.
    mean = jnp.mean(weights[0].astype(jnp.float32), axis=0, keepdims=True)
    mean = mean.astype(x.dtype)

    itemsize = jnp.dtype(x.dtype).itemsize

    # --- Small-problem fallback: let XLA fuse it (launch overhead dominates).
    if not force_pallas and B * n_snp * itemsize < (1 << 20):
        return x * mean

    # --- Tile sizing: aligned tiles + cdiv grid (no exact-divisor demand). ---
    sublane_quantum = {4: 8, 2: 16, 1: 32}.get(itemsize, 8)
    max_tile_snp = max(128, (max_tile_snp // 128) * 128)
    max_tile_b = max(sublane_quantum, (max_tile_b // sublane_quantum) * sublane_quantum)

    # Full-dim blocks are always legal; otherwise use a 128-multiple lane tile
    # and a quantum-multiple sublane tile, relying on Pallas edge masking.
    tile_snp = n_snp if n_snp <= max_tile_snp else max_tile_snp
    tile_b = B if B <= max_tile_b else max_tile_b
    n_snp_tiles = pl.cdiv(n_snp, tile_snp)
    n_b_tiles = pl.cdiv(B, tile_b)

    # v7x megacore: guarantee >= 2 blocks on the parallel grid when worthwhile.
    if n_b_tiles * n_snp_tiles == 1 and n_snp >= 256:
        tile_snp = ((pl.cdiv(n_snp, 2) + 127) // 128) * 128
        n_snp_tiles = pl.cdiv(n_snp, tile_snp)

    # --- VMEM budget: x + out double-buffered plus the tiny mean row. -------
    block_bytes = (
        2 * tile_b * tile_snp * itemsize      # x (in), 2 buffers
        + 2 * tile_b * tile_snp * itemsize    # out, 2 buffers
        + 2 * 1 * tile_snp * itemsize         # mean row, 2 buffers
    )
    # Explicit limit: >= needed (v5e default is only 16 MiB), capped at the
    # v7x scoped default of 32 MiB so the same code runs on all generations.
    vmem_limit = int(min(max(2 * block_bytes + (2 << 20), 16 << 20), 32 << 20))

    return pl.pallas_call(
        _mul_mean_kernel,
        out_shape=jax.ShapeDtypeStruct((B, n_snp), x.dtype),
        grid_spec=pltpu.PrefetchScalarGridSpec(
            num_scalar_prefetch=0,
            grid=(n_b_tiles, n_snp_tiles),
            in_specs=[
                pl.BlockSpec((1, tile_snp), lambda i, j: (0, j)),       # mean
                pl.BlockSpec((tile_b, tile_snp), lambda i, j: (i, j)),  # x
            ],
            out_specs=pl.BlockSpec((tile_b, tile_snp), lambda i, j: (i, j)),
        ),
        compiler_params=pltpu.CompilerParams(
            dimension_semantics=("parallel", "parallel"),
            vmem_limit_bytes=vmem_limit,
        ),
    )(mean, x)


def reference_forward(x, weights):
    return x * jnp.mean(weights, axis=1)   # (1, n_snp) broadcast over batch


if __name__ == "__main__":
    # Module defaults: n_QT=10, n_snp=3000 (non-multiple of 128 -> exercises
    # the cdiv grid + masked edge tile); small batch.
    B, n_QT, n_snp = 8, 10, 3000

    key = jax.random.PRNGKey(0)
    k_w, k_x = jax.random.split(key)

    # Mimic torch.rand: uniform [0, 1) parameter init.
    weights = jax.random.uniform(k_w, (1, n_QT, n_snp), dtype=jnp.float32)
    x = jax.random.normal(k_x, (B, n_snp), dtype=jnp.float32)

    ref = reference_forward(x, weights)

    # Force the Pallas path so the kernel is actually exercised at this size.
    out = input_layer_forward(x, weights, force_pallas=True)
    out = jax.block_until_ready(out)
    assert out.shape == (B, n_snp)
    assert jnp.allclose(out, ref, atol=1e-5, rtol=1e-5), "pallas mismatch vs reference"

    # Default dispatch (small-size XLA fallback) must also match.
    out_fb = jax.block_until_ready(input_layer_forward(x, weights))
    assert jnp.allclose(out_fb, ref, atol=1e-5, rtol=1e-5), "fallback mismatch vs reference"

    print("KERNEL_OK")
</pallas_src>

<mosaic_0001>
module attributes {stable_mosaic.version = 11 : i64} {
  func.func @_mul_mean_kernel(%arg0: i32, %arg1: i32, %arg2: memref<1x2048xf32, #tpu.memory_space<vmem>>, %arg3: memref<8x2048xf32, #tpu.memory_space<vmem>>, %arg4: memref<8x2048xf32, #tpu.memory_space<vmem>>) attributes {dimension_semantics = [#tpu.dimension_semantics<parallel>, #tpu.dimension_semantics<parallel>], iteration_bounds = array<i64: 1, 2>, scalar_prefetch = 0 : i64, scratch_operands = 0 : i64, tpu.core_type = #tpu.core_type<tc>, window_params = [{transform_indices = @transform_0, window_bounds = array<i64: 1, 2048>}, {transform_indices = @transform_1, window_bounds = array<i64: 8, 2048>}, {transform_indices = @transform_2, window_bounds = array<i64: 8, 2048>}]} {
    %c0 = arith.constant 0 : index
    %c0_0 = arith.constant 0 : index
    %0 = vector.load %arg3[%c0, %c0_0] : memref<8x2048xf32, #tpu.memory_space<vmem>>, vector<8x2048xf32>
    %c0_1 = arith.constant 0 : index
    %c0_2 = arith.constant 0 : index
    %1 = vector.load %arg2[%c0_1, %c0_2] : memref<1x2048xf32, #tpu.memory_space<vmem>>, vector<1x2048xf32>
    %2 = vector.broadcast %1 : vector<1x2048xf32> to vector<8x2048xf32>
    %3 = arith.mulf %0, %2 : vector<8x2048xf32>
    %c0_3 = arith.constant 0 : index
    %c0_4 = arith.constant 0 : index
    %4 = vector.load %arg4[%c0_3, %c0_4] : memref<8x2048xf32, #tpu.memory_space<vmem>>, vector<8x2048xf32>
    tpu.vector_store %arg4[%c0_3, %c0_4], %3 {strides = array<i32>} : memref<8x2048xf32, #tpu.memory_space<vmem>>, vector<8x2048xf32>,
    return
  }
  func.func @transform_0(%arg0: i32, %arg1: i32) -> (i32, i32) {
    %c0_i32 = arith.constant 0 : i32
    %c0_i32_0 = arith.constant 0 : i32
    return %c0_i32, %arg1 : i32, i32
  }
  func.func @transform_1(%arg0: i32, %arg1: i32) -> (i32, i32) {
    %c0_i32 = arith.constant 0 : i32
    return %arg0, %arg1 : i32, i32
  }
  func.func @transform_2(%arg0: i32, %arg1: i32) -> (i32, i32) {
    %c0_i32 = arith.constant 0 : i32
    return %arg0, %arg1 : i32, i32
  }
}

</mosaic_0001>

<llo_original>
// kernel: tpu_custom_call.1
$region0: #{tpu_custom_call.1}
  #allocation0 [shape = 'u32[]', space=smem, size = 0x4, offset = 0x4, fixed_abs, tag = 'smem constant byte address 0x4 - core index']
  #allocation1 [shape = 'u32[144,128]{1,0:T(1,128)}', space=vmem, size = 0x12000, scoped, tag = 'internal scratch']
  %s0 = inlined_call_operand.hbm [shape: f32[1,3000], index: 0, kind: input, shape index: {}]
  %s1 = inlined_call_operand.hbm [shape: f32[8,3000], index: 1, kind: input, shape index: {}]
  %s2 = inlined_call_operand.hbm [shape: f32[8,3000], index: 2, kind: output, shape index: {}]
  %s3 = sld [smem:[#allocation0]]
  $region49: #{tpu_custom_call.1} parent=0
    _
  %s5 = ssub.s32 1, %s3
  %s6 = scalar_select 0, %s5, %s3
  $region1: #{tpu_custom_call.1} parent=0
    #allocation2 [shape = 'u8[16384]{0}', space=vmem, size = 0x4000, scoped, tag = 'input window, operand 0']
    #allocation3 [shape = 's32[2]{0}', space=sflag, size = 0x8, scoped, tag = 'scoped memory for tpu_custom_call.1']
    #allocation4 [shape = 's32[2]{0}', space=sflag, size = 0x8, scoped, tag = 'scoped memory for tpu_custom_call.1']
    #allocation5 [shape = 'u8[131072]{0}', space=vmem, size = 0x20000, scoped, tag = 'input window, operand 1']
    #allocation6 [shape = 's32[2]{0}', space=sflag, size = 0x8, scoped, tag = 'scoped memory for tpu_custom_call.1']
    #allocation7 [shape = 'u8[131072]{0}', space=vmem, size = 0x20000, scoped, tag = 'output window, operand 0']
    %7 = vsyncpa [#allocation3], 0
    %s8 = scalar_lea.sflag [#allocation3], 1
    %9 = vsyncpa %s8, 0
    %10 = vsyncpa [#allocation6], 0
    %s11 = scalar_lea.sflag [#allocation6], 1
    %12 = vsyncpa %s11, 0
    %13 = vsyncpa [#allocation4], 0
    %s14 = scalar_lea.sflag [#allocation4], 1
    %15 = vsyncpa %s14, 0
    loop: start=0, step=1, limit=4
    $region2: #{tpu_custom_call.1} parent=1 // loop_pre_header
      _
    $region3: #{tpu_custom_call.1} parent=1 // loop_header
      %s17 = sphi 0, %s21
      %p18 = scmp.ge.s32.totalorder %s17, 4
      %s24 = sphi 0, %s36
      %s25 = sphi 0, %s32
      %s26 = sphi 0, %s24
      %s27 = sphi 0, %s25
      %s28 = sphi 0, %s26
      %s29 = sphi 0, %s27
      %s39 = sphi 0, %s41
      %s42 = sphi 0, %s39
      %s43 = sphi 0, %s42
      %s59 = sphi 0, %s43
      %s67 = sphi 0, %s69
      %s70 = sphi 0, %s67
      %s71 = sphi 0, %s70
      %s87 = sphi 0, %s71
      %s95 = sphi 0, %s97
      %s98 = sphi 0, %s95
      %s99 = sphi 0, %s98
      %s115 = sphi 0, %s99
    $region4: #{tpu_custom_call.1} parent=1 // loop_header_branch
      %20 = sbr.rel (%p18) target = $region8
    $region5: #{tpu_custom_call.1} parent=1 // loop_body
      %s22 = ssub.s32 %s17, 1
      %s23 = ssub.s32 %s17, 2
      %s30 = sadd.s32 1, %s25
      %p31 = scmp.ge.s32.totalorder %s30, 2
      %s32 = scalar_select %p31, 0, %s30
      %s33 = sadd.s32 1, %s24
      %s34 = scalar_select %p31, %s33, %s24
      %p35 = scmp.ge.s32.totalorder %s34, 1
      %s36 = scalar_select %p35, 0, %s34
      %s37 = ssub.s32 %s25, %s32
      %p38 = scmp.eq.s32.totalorder %s37, 0
      %s40 = sadd.s32 %s39, 1
      %s41 = scalar_select %p38, %s39, %s40
      %p44 = pneg %p38
      %p45 = scmp.eq.s32.totalorder %s17, 1
      %p46 = por %p44, %p45
      %p47 = scmp.ne.s32.totalorder %s39, %s42
      %p48 = scmp.eq.s32.totalorder %s17, 0
      %p49 = por %p47, %p48
      %p50 = scmp.ne.s32.totalorder %s39, %s42
      %p51 = scmp.eq.s32.totalorder %s22, 1
      %p52 = por %p50, %p51
      %p53 = scmp.ne.s32.totalorder %s42, %s43
      %p54 = scmp.eq.s32.totalorder %s22, 0
      %p55 = por %p53, %p54
      %p56 = scmp.ne.s32.totalorder %s42, %s43
      %p57 = scmp.eq.s32.totalorder %s23, 1
      %p58 = por %p56, %p57
      %p60 = scmp.ne.s32.totalorder %s43, %s59
      %p61 = scmp.eq.s32.totalorder %s23, 0
      %p62 = por %p60, %p61
      %s63 = ssub.s32 %s24, %s36
      %s64 = ssub.s32 %s25, %s32
      %s65 = sor.u32 %s63, %s64
      %p66 = scmp.eq.s32.totalorder %s65, 0
      %s68 = sadd.s32 %s67, 1
      %s69 = scalar_select %p66, %s67, %s68
      %p72 = pneg %p66
      %p73 = scmp.eq.s32.totalorder %s17, 1
      %p74 = por %p72, %p73
      %p75 = scmp.ne.s32.totalorder %s67, %s70
      %p76 = scmp.eq.s32.totalorder %s17, 0
      %p77 = por %p75, %p76
      %p78 = scmp.ne.s32.totalorder %s67, %s70
      %p79 = scmp.eq.s32.totalorder %s22, 1
      %p80 = por %p78, %p79
      %p81 = scmp.ne.s32.totalorder %s70, %s71
      %p82 = scmp.eq.s32.totalorder %s22, 0
      %p83 = por %p81, %p82
      %p84 = scmp.ne.s32.totalorder %s70, %s71
      %p85 = scmp.eq.s32.totalorder %s23, 1
      %p86 = por %p84, %p85
      %p88 = scmp.ne.s32.totalorder %s71, %s87
      %p89 = scmp.eq.s32.totalorder %s23, 0
      %p90 = por %p88, %p89
      %s91 = ssub.s32 %s24, %s36
      %s92 = ssub.s32 %s25, %s32
      %s93 = sor.u32 %s91, %s92
      %p94 = scmp.eq.s32.totalorder %s93, 0
      %s96 = sadd.s32 %s95, 1
      %s97 = scalar_select %p94, %s95, %s96
      %p100 = pneg %p94
      %p101 = scmp.eq.s32.totalorder %s17, 1
      %p102 = por %p100, %p101
      %p103 = scmp.ne.s32.totalorder %s95, %s98
      %p104 = scmp.eq.s32.totalorder %s17, 0
      %p105 = por %p103, %p104
      %p106 = scmp.ne.s32.totalorder %s95, %s98
      %p107 = scmp.eq.s32.totalorder %s22, 1
      %p108 = por %p106, %p107
      %p109 = scmp.ne.s32.totalorder %s98, %s99
      %p110 = scmp.eq.s32.totalorder %s22, 0
      %p111 = por %p109, %p110
      %p112 = scmp.ne.s32.totalorder %s98, %s99
      %p113 = scmp.eq.s32.totalorder %s23, 1
      %p114 = por %p112, %p113
      %p116 = scmp.ne.s32.totalorder %s99, %s115
      %p117 = scmp.eq.s32.totalorder %s23, 0
      %p118 = por %p116, %p117
      %p119 = scmp.le.s32.totalorder 1, %s17
      %p120 = scmp.lt.s32.totalorder %s17, 3
      %p121 = pnand %p119, %p120
      %p122 = pneg %p121
      // Predicated region
      $region9: #{tpu_custom_call.1} parent=5 // pred_check
        _
      $region10: #{tpu_custom_call.1} parent=5 // pred_check_branch
        %124 = sbr.rel (%p121) target = $region12
      $region11: #{tpu_custom_call.1} parent=5 // pred_region
        %s125 = ssub.s32 %s17, 1
      $region12: #{tpu_custom_call.1} parent=5 // pred_fallthru
        _
      %p126 = scmp.lt.s32.totalorder %s17, 2
      // Predicated region
      $region13: #{tpu_custom_call.1} parent=5 // pred_check
        %p127 = pneg %p126
      $region14: #{tpu_custom_call.1} parent=5 // pred_check_branch
        %129 = sbr.rel (%p127) target = $region16
      $region15: #{tpu_custom_call.1} parent=5 // pred_region
        // Predicated region
        $region17: #{tpu_custom_call.1} parent=15 // pred_check
          %p130 = pneg %p49
        $region18: #{tpu_custom_call.1} parent=15 // pred_check_branch
          %132 = sbr.rel (%p130) target = $region20
        $region19: #{tpu_custom_call.1} parent=15 // pred_region
          %s133 = sand.u32 %s39, 1
          %s134 = scalar_lea.sflag [#allocation3], %s133
          %s135 = sand.u32 %s39, 1
          %s136 = smul.addr %s135, 16
          %s137 = scalar_lea.vmem [#allocation2], %s136
          %s138 = smul.u32 16, %s25
          %s139 = ssub.s32 24, %s138
          %p140 = scmp.lt.s32.totalorder %s139, 16
          %s141 = scalar_select %p140, %s139, 16
          %s142 = smul.u32 16, %s141
          %s144 = ssub.s32 256, %s142
          %145 = vsyncadd %s134, %s144
          %p146 = scmp.ne.s32.totalorder 0, %s142
          %s147 = smul.addr %s138, 16
          %s148 = scalar_lea.hbm %s0, %s147
          %s149 = sshll.u32 %s141, 4
          %s150 = sshll.u32 %s137, 4
          %s151 = int_to_ptr.vmem [resolvable:$true] %s150
          %153 = dma.hbm_to_vmem [thread:$0]  (%p146), %s148, %s149, %s151, %s134
        $region20: #{tpu_custom_call.1} parent=15 // pred_fallthru
          _
        // Predicated region
        $region21: #{tpu_custom_call.1} parent=15 // pred_check
          %p154 = pneg %p77
        $region22: #{tpu_custom_call.1} parent=15 // pred_check_branch
          %156 = sbr.rel (%p154) target = $region24
        $region23: #{tpu_custom_call.1} parent=15 // pred_region
          %s157 = sand.u32 %s67, 1
          %s158 = scalar_lea.sflag [#allocation6], %s157
          %s159 = sand.u32 %s67, 1
          %s160 = smul.addr %s159, 128
          %s161 = scalar_lea.vmem [#allocation5], %s160
          %s162 = smul.u32 16, %s25
          %s163 = ssub.s32 24, %s162
          %p164 = scmp.lt.s32.totalorder %s163, 16
          %s165 = scalar_select %p164, %s163, 16
          %s166 = smul.u32 128, %s165
          %s168 = ssub.s32 2048, %s166
          %169 = vsyncadd %s158, %s168
          %p170 = scmp.ne.s32.totalorder 0, %s166
          %s171 = smul.addr %s24, 24
          %s172 = sadd.s32 %s162, %s171
          %s173 = smul.addr %s172, 128
          %s174 = scalar_lea.hbm %s1, %s173
          %s175 = smul.u32 %s165, 8
          %s176 = sshll.u32 %s175, 4
          %s177 = sshll.u32 %s161, 4
          %s178 = int_to_ptr.vmem [resolvable:$true] %s177
          %180 = dma.hbm_to_vmem [thread:$0]  (%p170), %s174, %s176, %s178, %s158
        $region24: #{tpu_custom_call.1} parent=15 // pred_fallthru
          _
      $region16: #{tpu_custom_call.1} parent=5 // pred_fallthru
        _
      %p181 = scmp.le.s32.totalorder 1, %s17
      %p182 = scmp.lt.s32.totalorder %s17, 3
      %p183 = pnand %p181, %p182
      %p184 = pneg %p183
      // Predicated region
      $region25: #{tpu_custom_call.1} parent=5 // pred_check
        _
      $region26: #{tpu_custom_call.1} parent=5 // pred_check_branch
        %186 = sbr.rel (%p183) target = $region28
      $region27: #{tpu_custom_call.1} parent=5 // pred_region
        %s187 = ssub.s32 %s17, 1
        %s188 = sand.u32 %s42, 1
        %s189 = scalar_lea.sflag [#allocation3], %s188
        %s190 = sand.u32 %s42, 1
        %s191 = smul.addr %s190, 16
        %s192 = scalar_lea.vmem [#allocation2], %s191
        // Predicated region
        $region29: #{tpu_custom_call.1} parent=27 // pred_check
          %p193 = pneg %p55
        $region30: #{tpu_custom_call.1} parent=27 // pred_check_branch
          %195 = sbr.rel (%p193) target = $region32
        $region31: #{tpu_custom_call.1} parent=27 // pred_region
          %196 = dma.done %s189, 256
        $region32: #{tpu_custom_call.1} parent=27 // pred_fallthru
          _
        %s197 = sand.u32 %s70, 1
        %s198 = scalar_lea.sflag [#allocation6], %s197
        %s199 = sand.u32 %s70, 1
        %s200 = smul.addr %s199, 128
        %s201 = scalar_lea.vmem [#allocation5], %s200
        // Predicated region
        $region33: #{tpu_custom_call.1} parent=27 // pred_check
          %p202 = pneg %p83
        $region34: #{tpu_custom_call.1} parent=27 // pred_check_branch
          %204 = sbr.rel (%p202) target = $region36
        $region35: #{tpu_custom_call.1} parent=27 // pred_region
          %205 = dma.done %s198, 2048
        $region36: #{tpu_custom_call.1} parent=27 // pred_fallthru
          _
        %s206 = sand.u32 %s42, 1
        %s207 = scalar_lea.sflag [#allocation3], %s206
        %s208 = sand.u32 %s42, 1
        %s209 = smul.addr %s208, 16
        %s210 = scalar_lea.vmem [#allocation2], %s209
        %p211 = pneg %p55
        %p212 = pneg %p52
        %s213 = sand.u32 %s70, 1
        %s214 = scalar_lea.sflag [#allocation6], %s213
        %s215 = sand.u32 %s70, 1
        %s216 = smul.addr %s215, 128
        %s217 = scalar_lea.vmem [#allocation5], %s216
        %p218 = pneg %p83
        %p219 = pneg %p80
        %p220 = pneg %p111
        %p221 = pneg %p108
        %s222 = sand.u32 %s98, 1
        %s223 = scalar_lea.sflag [#allocation4], %s222
        %s224 = sand.u32 %s98, 1
        %s225 = smul.addr %s224, 128
        %s226 = scalar_lea.vmem [#allocation7], %s225
        %s227 = smul.u32 16, %s27
        %s228 = ssub.s32 24, %s227
        %p229 = scmp.lt.s32.totalorder %s228, 16
        %s230 = scalar_select %p229, %s228, 16
        %s231 = smul.u32 16, %s230
        %s232 = smul.u32 16, %s27
        %s233 = ssub.s32 24, %s232
        %p234 = scmp.lt.s32.totalorder %s233, 16
        %s235 = scalar_select %p234, %s233, 16
        %s236 = smul.u32 128, %s235
        %s237 = smul.u32 16, %s27
        %s238 = ssub.s32 24, %s237
        %p239 = scmp.lt.s32.totalorder %s238, 16
        %s240 = scalar_select %p239, %s238, 16
        %s241 = smul.u32 128, %s240
        %v242 = vld [vmem:[%s201] sm:$0xff]
        %v243 = vld [vmem:[%s201 + $0x8] sm:$0xff]
        %v244 = vld [vmem:[%s201 + $0x10] sm:$0xff]
        %v245 = vld [vmem:[%s201 + $0x18] sm:$0xff]
        %v246 = vld [vmem:[%s201 + $0x20] sm:$0xff]
        %v247 = vld [vmem:[%s201 + $0x28] sm:$0xff]
        %v248 = vld [vmem:[%s201 + $0x30] sm:$0xff]
        %v249 = vld [vmem:[%s201 + $0x38] sm:$0xff]
        %v250 = vld [vmem:[%s201 + $0x40] sm:$0xff]
        %v251 = vld [vmem:[%s201 + $0x48] sm:$0xff]
        %v252 = vld [vmem:[%s201 + $0x50] sm:$0xff]
        %v253 = vld [vmem:[%s201 + $0x58] sm:$0xff]
        %v254 = vld [vmem:[%s201 + $0x60] sm:$0xff]
        %v255 = vld [vmem:[%s201 + $0x68] sm:$0xff]
        %v256 = vld [vmem:[%s201 + $0x70] sm:$0xff]
        %v257 = vld [vmem:[%s201 + $0x78] sm:$0xff]
        %v258 = vld [vmem:[%s192] sm:$0xff]
        %v259 = vld [vmem:[%s192 + $0x8] sm:$0xff]
        %v262 = vlaneseq
        %v263 = vshrl.u32 %v262, 7
        %v264 = vsub.s32 0, %v263
        %v265 = vrot.slane %v258, %v264
        %v266 = vlaneseq
        %v267 = vshrl.u32 %v266, 7
        %v268 = vsub.s32 1, %v267
        %v269 = vrot.slane %v258, %v268
        %v270 = vlaneseq
        %v271 = vshrl.u32 %v270, 7
        %v272 = vsub.s32 2, %v271
        %v273 = vrot.slane %v258, %v272
        %v274 = vlaneseq
        %v275 = vshrl.u32 %v274, 7
        %v276 = vsub.s32 3, %v275
        %v277 = vrot.slane %v258, %v276
        %v278 = vlaneseq
        %v279 = vshrl.u32 %v278, 7
        %v280 = vsub.s32 4, %v279
        %v281 = vrot.slane %v258, %v280
        %v282 = vlaneseq
        %v283 = vshrl.u32 %v282, 7
        %v284 = vsub.s32 5, %v283
        %v285 = vrot.slane %v258, %v284
        %v286 = vlaneseq
        %v287 = vshrl.u32 %v286, 7
        %v288 = vsub.s32 6, %v287
        %v289 = vrot.slane %v258, %v288
        %v290 = vlaneseq
        %v291 = vshrl.u32 %v290, 7
        %v292 = vsub.s32 7, %v291
        %v293 = vrot.slane %v258, %v292
        %v294 = vlaneseq
        %v295 = vshrl.u32 %v294, 7
        %v296 = vsub.s32 0, %v295
        %v297 = vrot.slane %v259, %v296
        %v298 = vlaneseq
        %v299 = vshrl.u32 %v298, 7
        %v300 = vsub.s32 1, %v299
        %v301 = vrot.slane %v259, %v300
        %v302 = vlaneseq
        %v303 = vshrl.u32 %v302, 7
        %v304 = vsub.s32 2, %v303
        %v305 = vrot.slane %v259, %v304
        %v306 = vlaneseq
        %v307 = vshrl.u32 %v306, 7
        %v308 = vsub.s32 3, %v307
        %v309 = vrot.slane %v259, %v308
        %v310 = vlaneseq
        %v311 = vshrl.u32 %v310, 7
        %v312 = vsub.s32 4, %v311
        %v313 = vrot.slane %v259, %v312
        %v314 = vlaneseq
        %v315 = vshrl.u32 %v314, 7
        %v316 = vsub.s32 5, %v315
        %v317 = vrot.slane %v259, %v316
        %v318 = vlaneseq
        %v319 = vshrl.u32 %v318, 7
        %v320 = vsub.s32 6, %v319
        %v321 = vrot.slane %v259, %v320
        %v322 = vlaneseq
        %v323 = vshrl.u32 %v322, 7
        %v324 = vsub.s32 7, %v323
        %v325 = vrot.slane %v259, %v324
        %v342 = vmul.f32 %v242, %v265
        %v343 = vmul.f32 %v243, %v269
        %v344 = vmul.f32 %v244, %v273
        %v345 = vmul.f32 %v245, %v277
        %v346 = vmul.f32 %v246, %v281
        %v347 = vmul.f32 %v247, %v285
        %v348 = vmul.f32 %v248, %v289
        %v349 = vmul.f32 %v249, %v293
        %v350 = vmul.f32 %v250, %v297
        %v351 = vmul.f32 %v251, %v301
        %v352 = vmul.f32 %v252, %v305
        %v353 = vmul.f32 %v253, %v309
        %v354 = vmul.f32 %v254, %v313
        %v355 = vmul.f32 %v255, %v317
        %v356 = vmul.f32 %v256, %v321
        %v357 = vmul.f32 %v257, %v325
        %358 = vst [vmem:[%s226] sm:$0xff] %v342
        %359 = vst [vmem:[%s226 + $0x8] sm:$0xff] %v343
        %360 = vst [vmem:[%s226 + $0x10] sm:$0xff] %v344
        %361 = vst [vmem:[%s226 + $0x18] sm:$0xff] %v345
        %362 = vst [vmem:[%s226 + $0x20] sm:$0xff] %v346
        %363 = vst [vmem:[%s226 + $0x28] sm:$0xff] %v347
        %364 = vst [vmem:[%s226 + $0x30] sm:$0xff] %v348
        %365 = vst [vmem:[%s226 + $0x38] sm:$0xff] %v349
        %366 = vst [vmem:[%s226 + $0x40] sm:$0xff] %v350
        %367 = vst [vmem:[%s226 + $0x48] sm:$0xff] %v351
        %368 = vst [vmem:[%s226 + $0x50] sm:$0xff] %v352
        %369 = vst [vmem:[%s226 + $0x58] sm:$0xff] %v353
        %370 = vst [vmem:[%s226 + $0x60] sm:$0xff] %v354
        %371 = vst [vmem:[%s226 + $0x68] sm:$0xff] %v355
        %372 = vst [vmem:[%s226 + $0x70] sm:$0xff] %v356
        %373 = vst [vmem:[%s226 + $0x78] sm:$0xff] %v357
        %s374 = sand.u32 %s98, 1
        %s375 = scalar_lea.sflag [#allocation4], %s374
        %s376 = sand.u32 %s98, 1
        %s377 = smul.addr %s376, 128
        %s378 = scalar_lea.vmem [#allocation7], %s377
        // Predicated region
        $region37: #{tpu_custom_call.1} parent=27 // pred_check
          %p379 = pneg %p108
        $region38: #{tpu_custom_call.1} parent=27 // pred_check_branch
          %381 = sbr.rel (%p379) target = $region40
        $region39: #{tpu_custom_call.1} parent=27 // pred_region
          %s382 = smul.u32 16, %s27
          %s383 = ssub.s32 24, %s382
          %p384 = scmp.lt.s32.totalorder %s383, 16
          %s385 = scalar_select %p384, %s383, 16
          %s386 = smul.u32 128, %s385
          %s388 = ssub.s32 2048, %s386
          %389 = vsyncadd %s375, %s388
          %p390 = scmp.ne.s32.totalorder 0, %s386
          %s391 = smul.addr %s26, 24
          %s392 = sadd.s32 %s382, %s391
          %s393 = smul.addr %s392, 128
          %s394 = scalar_lea.hbm %s2, %s393
          %s395 = smul.u32 %s385, 8
          %s396 = sshll.u32 %s395, 4
          %s397 = sshll.u32 %s378, 4
          %s398 = int_to_ptr.vmem [resolvable:$true] %s397
          %400 = dma.vmem_to_hbm [thread:$0]  (%p390), %s398, %s396, %s394, %s375
        $region40: #{tpu_custom_call.1} parent=27 // pred_fallthru
          _
      $region28: #{tpu_custom_call.1} parent=5 // pred_fallthru
        _
      %p401 = scmp.le.s32.totalorder 2, %s17
      // Predicated region
      $region41: #{tpu_custom_call.1} parent=5 // pred_check
        %p402 = pneg %p401
      $region42: #{tpu_custom_call.1} parent=5 // pred_check_branch
        %404 = sbr.rel (%p402) target = $region44
      $region43: #{tpu_custom_call.1} parent=5 // pred_region
        %s405 = ssub.s32 %s17, 2
        // Predicated region
        $region45: #{tpu_custom_call.1} parent=43 // pred_check
          %p406 = pneg %p114
        $region46: #{tpu_custom_call.1} parent=43 // pred_check_branch
          %408 = sbr.rel (%p406) target = $region48
        $region47: #{tpu_custom_call.1} parent=43 // pred_region
          %s409 = sand.u32 %s99, 1
          %s410 = scalar_lea.sflag [#allocation4], %s409
          %s411 = sand.u32 %s99, 1
          %s412 = smul.addr %s411, 128
          %s413 = scalar_lea.vmem [#allocation7], %s412
          %414 = dma.done %s410, 2048
        $region48: #{tpu_custom_call.1} parent=43 // pred_fallthru
          _
      $region44: #{tpu_custom_call.1} parent=5 // pred_fallthru
        _
    $region6: #{tpu_custom_call.1} parent=1 // loop_footer
      %s21 = sadd.s32 1, %s17
    $region7: #{tpu_custom_call.1} parent=1 // loop_footer_branch
      %16 = sbr.rel target = $region3
    $region8: #{tpu_custom_call.1} parent=1 // loop_exit
      _
    %415 = vsyncpa [#allocation3], 1
    %s416 = scalar_lea.sflag [#allocation3], 1
    %417 = vsyncpa %s416, 1
    %418 = vsyncpa [#allocation6], 1
    %s419 = scalar_lea.sflag [#allocation6], 1
    %420 = vsyncpa %s419, 1
    %421 = vsyncpa [#allocation4], 1
    %s422 = scalar_lea.sflag [#allocation4], 1
    %423 = vsyncpa %s422, 1

</llo_original>
